<compile_context>
chip_gen: v7x
topology: tpu7x:2x2x1
jax: 0.10.0
libtpu: 0.0.40
codegen_flags: <defaults>
</compile_context>

<pallas_src>
import functools

import jax
import jax.numpy as jnp
from jax.experimental import pallas as pl
from jax.experimental.pallas import tpu as pltpu


def _channel_attention_kernel(x_ref, w1_ref, w2_ref, out_ref, sum_acc, max_acc,
                              *, hw_total, hw_tile, needs_mask):
    hw_i = pl.program_id(1)
    n_hw = pl.num_programs(1)

    @pl.when(hw_i == 0)
    def _init():
        sum_acc[...] = jnp.zeros_like(sum_acc)
        max_acc[...] = jnp.full_like(max_acc, -jnp.inf)

    b, _, _ = x_ref.shape
    lanes = 128 if hw_tile % 128 == 0 else hw_tile   # full-HW block may be <128 / unaligned
    n_chunks = hw_tile // lanes

    x = x_ref[...].astype(jnp.float32)               # (B, C, HW_TILE); f32 accumulation

    # Reduce the spatial tile with elementwise VPU ops over 128-lane chunks;
    # keep the partials in registers and touch the scratch accumulators once.
    loc_sum = None
    loc_max = None
    for ti in range(n_chunks):
        chunk = x[:, :, ti * lanes:(ti + 1) * lanes]                   # (B, C, LANES)
        if needs_mask:
            pos = (hw_i * hw_tile + ti * lanes
                   + jax.lax.broadcasted_iota(jnp.int32, (1, lanes), 1))
            valid = (pos < hw_total)[None]                             # (1, 1, LANES)
            c_sum = jnp.where(valid, chunk, 0.0)
            c_max = jnp.where(valid, chunk, -jnp.inf)
        else:
            c_sum = chunk
            c_max = chunk
        loc_sum = c_sum if loc_sum is None else loc_sum + c_sum
        loc_max = c_max if loc_max is None else jnp.maximum(loc_max, c_max)

    sum_acc[...] = sum_acc[...] + loc_sum
    max_acc[...] = jnp.maximum(max_acc[...], loc_max)

    # Finalize: one cross-lane reduce, fused (2B, C) shared MLP, sigmoid, store.
    @pl.when(hw_i == n_hw - 1)
    def _finalize():
        inv_hw = jnp.float32(1.0 / hw_total)
        avg = jnp.sum(sum_acc[...], axis=-1) * inv_hw                  # (B, C)
        mx = jnp.max(max_acc[...], axis=-1)                            # (B, C)
        pooled = jnp.concatenate([avg, mx], axis=0)                    # (2B, C)
        h = jnp.dot(pooled, w1_ref[...],
                    preferred_element_type=jnp.float32)                # (2B, hidden)
        h = jnp.maximum(h, 0.0)                                        # ReLU
        z = jnp.dot(h, w2_ref[...],
                    preferred_element_type=jnp.float32)                # (2B, C)
        z = z[:b] + z[b:]                                              # avg path + max path
        out_ref[...] = jax.nn.sigmoid(z).astype(out_ref.dtype)


def _choose_tiles(n, c, hw, itemsize, *, target_bytes=4 << 20, max_hw_tile=2048):
    """Pick (batch_tile, hw_tile): x blocks a few hundred KB - few MB, lane-dense
    (multiple of 128 when the spatial axis is tiled), fitting double-buffered
    scoped VMEM on every TPU generation (v5e 16 MiB default, v7x 64 MiB phys)."""
    row_bytes = c * hw * itemsize
    if hw <= max_hw_tile and row_bytes <= target_bytes:
        hw_tile = hw                                  # single spatial step, no mask
    else:
        lane_budget = max(128, (target_bytes // (c * itemsize)) // 128 * 128)
        hw_tile = int(min(max_hw_tile, lane_budget))
        if hw >= 128:
            hw_tile = min(hw_tile, (hw // 128) * 128)  # multiple of 128 lanes
        else:
            hw_tile = hw                               # tiny spatial extent: full block
    b_tile = int(max(1, min(n, target_bytes // max(1, c * hw_tile * itemsize))))
    return b_tile, int(hw_tile)


def channel_attention(x, w1, w2):
    """CBAM channel attention forward.

    Args:
      x:  (N, C, H, W) activations (any float dtype; accumulation is f32 in-kernel).
      w1: (C, hidden)  == fc1.weight[:, :, 0, 0].T
      w2: (hidden, C)  == fc2.weight[:, :, 0, 0].T
    Returns:
      (N, C, 1, 1) attention weights, matching the PyTorch module's output.
    """
    n, c, h, w = x.shape
    hw = h * w
    hidden = w1.shape[1]
    assert w1.shape == (c, hidden) and w2.shape == (hidden, c)

    x_flat = x.reshape(n, c, hw)
    b_tile, hw_tile = _choose_tiles(n, c, hw, x_flat.dtype.itemsize)
    needs_mask = (hw % hw_tile) != 0
    lanes = 128 if hw_tile % 128 == 0 else hw_tile

    kernel = functools.partial(
        _channel_attention_kernel,
        hw_total=hw, hw_tile=hw_tile, needs_mask=needs_mask)

    out = pl.pallas_call(
        kernel,
        out_shape=jax.ShapeDtypeStruct((n, c), x.dtype),
        grid_spec=pltpu.PrefetchScalarGridSpec(
            num_scalar_prefetch=0,
            grid=(pl.cdiv(n, b_tile), pl.cdiv(hw, hw_tile)),
            in_specs=[
                pl.BlockSpec((b_tile, c, hw_tile), lambda i, j: (i, 0, j)),
                pl.BlockSpec((c, hidden), lambda i, j: (0, 0)),
                pl.BlockSpec((hidden, c), lambda i, j: (0, 0)),
            ],
            out_specs=pl.BlockSpec((b_tile, c), lambda i, j: (i, 0)),
            scratch_shapes=[
                pltpu.VMEM((b_tile, c, lanes), jnp.float32),   # running sum
                pltpu.VMEM((b_tile, c, lanes), jnp.float32),   # running max
            ],
        ),
        compiler_params=pltpu.CompilerParams(
            dimension_semantics=("parallel", "arbitrary"),
            vmem_limit_bytes=32 * 1024 * 1024,
        ),
    )(x_flat, w1, w2)

    return out.reshape(n, c, 1, 1)


if __name__ == "__main__":
    key = jax.random.PRNGKey(0)
    N, C, H, W = 2, 16, 16, 16
    reduction_ratio = 4
    hidden = C // reduction_ratio

    kx, k1, k2 = jax.random.split(key, 3)
    x = jax.random.normal(kx, (N, C, H, W), dtype=jnp.float32)
    # Conv2d 1x1 (bias=False) weights, stored transposed for the kernel.
    w1 = (jax.random.normal(k1, (hidden, C), dtype=jnp.float32) * 0.1).T  # (C, hidden)
    w2 = (jax.random.normal(k2, (C, hidden), dtype=jnp.float32) * 0.1).T  # (hidden, C)

    out = channel_attention(x, w1, w2)
    out = jax.block_until_ready(out)

    # Pure-JAX reference of the PyTorch forward semantics.
    avg = jnp.mean(x, axis=(2, 3))          # AdaptiveAvgPool2d(1)
    mx = jnp.max(x, axis=(2, 3))            # AdaptiveMaxPool2d(1)
    mlp = lambda v: jnp.maximum(v @ w1, 0.0) @ w2
    ref = jax.nn.sigmoid(mlp(avg) + mlp(mx)).reshape(N, C, 1, 1)

    assert out.shape == (N, C, 1, 1)
    assert jnp.allclose(out, ref, atol=1e-5, rtol=1e-5), float(jnp.max(jnp.abs(out - ref)))

    print("KERNEL_OK")
</pallas_src>

<mosaic_0001>
module attributes {stable_mosaic.version = 11 : i64} {
  func.func @_channel_attention_kernel(%arg0: i32, %arg1: i32, %arg2: memref<2x16x256xf32, #tpu.memory_space<vmem>>, %arg3: memref<16x4xf32, #tpu.memory_space<vmem>>, %arg4: memref<4x16xf32, #tpu.memory_space<vmem>>, %arg5: memref<2x16xf32, #tpu.memory_space<vmem>>, %arg6: memref<2x16x128xf32, #tpu.memory_space<vmem>>, %arg7: memref<2x16x128xf32, #tpu.memory_space<vmem>>) attributes {dimension_semantics = [#tpu.dimension_semantics<parallel>, #tpu.dimension_semantics<arbitrary>], iteration_bounds = array<i64: 1, 1>, scalar_prefetch = 0 : i64, scratch_operands = 2 : i64, tpu.core_type = #tpu.core_type<tc>, window_params = [{transform_indices = @transform_0, window_bounds = array<i64: 2, 16, 256>}, {pipeline_mode = #tpu.pipeline_mode<synchronous>, transform_indices = @transform_1, window_bounds = array<i64: 16, 4>}, {pipeline_mode = #tpu.pipeline_mode<synchronous>, transform_indices = @transform_2, window_bounds = array<i64: 4, 16>}, {transform_indices = @transform_3, window_bounds = array<i64: 2, 16>}]} {
    %c0_i32 = arith.constant 0 : i32
    %0 = arith.cmpi eq, %arg1, %c0_i32 : i32
    %1 = arith.extui %0 : i1 to i32
    %c0_i32_0 = arith.constant 0 : i32
    %2 = arith.cmpi ne, %1, %c0_i32_0 : i32
    scf.if %2 {
      %cst = arith.constant 0.000000e+00 : f32
      %17 = vector.broadcast %cst : f32 to vector<2x16x128xf32>
      %c0_17 = arith.constant 0 : index
      %c0_18 = arith.constant 0 : index
      %c0_19 = arith.constant 0 : index
      %18 = vector.load %arg6[%c0_17, %c0_18, %c0_19] : memref<2x16x128xf32, #tpu.memory_space<vmem>>, vector<2x16x128xf32>
      tpu.vector_store %arg6[%c0_17, %c0_18, %c0_19], %17 {strides = array<i32>} : memref<2x16x128xf32, #tpu.memory_space<vmem>>, vector<2x16x128xf32>,
      %cst_20 = arith.constant 0xFF800000 : f32
      %19 = vector.broadcast %cst_20 : f32 to vector<2x16x128xf32>
      %c0_21 = arith.constant 0 : index
      %c0_22 = arith.constant 0 : index
      %c0_23 = arith.constant 0 : index
      %20 = vector.load %arg7[%c0_21, %c0_22, %c0_23] : memref<2x16x128xf32, #tpu.memory_space<vmem>>, vector<2x16x128xf32>
      tpu.vector_store %arg7[%c0_21, %c0_22, %c0_23], %19 {strides = array<i32>} : memref<2x16x128xf32, #tpu.memory_space<vmem>>, vector<2x16x128xf32>,
    } else {
    }
    %c0 = arith.constant 0 : index
    %c0_1 = arith.constant 0 : index
    %c0_2 = arith.constant 0 : index
    %3 = vector.load %arg2[%c0, %c0_1, %c0_2] : memref<2x16x256xf32, #tpu.memory_space<vmem>>, vector<2x16x256xf32>
    %4 = vector.extract_strided_slice %3 {offsets = [0, 0, 0], sizes = [2, 16, 128], strides = [1, 1, 1]} : vector<2x16x256xf32> to vector<2x16x128xf32>
    %5 = vector.extract_strided_slice %3 {offsets = [0, 0, 128], sizes = [2, 16, 128], strides = [1, 1, 1]} : vector<2x16x256xf32> to vector<2x16x128xf32>
    %6 = arith.addf %4, %5 : vector<2x16x128xf32>
    %7 = arith.maximumf %4, %5 : vector<2x16x128xf32>
    %c0_3 = arith.constant 0 : index
    %c0_4 = arith.constant 0 : index
    %c0_5 = arith.constant 0 : index
    %8 = vector.load %arg6[%c0_3, %c0_4, %c0_5] : memref<2x16x128xf32, #tpu.memory_space<vmem>>, vector<2x16x128xf32>
    %9 = arith.addf %8, %6 : vector<2x16x128xf32>
    %c0_6 = arith.constant 0 : index
    %c0_7 = arith.constant 0 : index
    %c0_8 = arith.constant 0 : index
    %10 = vector.load %arg6[%c0_6, %c0_7, %c0_8] : memref<2x16x128xf32, #tpu.memory_space<vmem>>, vector<2x16x128xf32>
    tpu.vector_store %arg6[%c0_6, %c0_7, %c0_8], %9 {strides = array<i32>} : memref<2x16x128xf32, #tpu.memory_space<vmem>>, vector<2x16x128xf32>,
    %c0_9 = arith.constant 0 : index
    %c0_10 = arith.constant 0 : index
    %c0_11 = arith.constant 0 : index
    %11 = vector.load %arg7[%c0_9, %c0_10, %c0_11] : memref<2x16x128xf32, #tpu.memory_space<vmem>>, vector<2x16x128xf32>
    %12 = arith.maximumf %11, %7 : vector<2x16x128xf32>
    %c0_12 = arith.constant 0 : index
    %c0_13 = arith.constant 0 : index
    %c0_14 = arith.constant 0 : index
    %13 = vector.load %arg7[%c0_12, %c0_13, %c0_14] : memref<2x16x128xf32, #tpu.memory_space<vmem>>, vector<2x16x128xf32>
    tpu.vector_store %arg7[%c0_12, %c0_13, %c0_14], %12 {strides = array<i32>} : memref<2x16x128xf32, #tpu.memory_space<vmem>>, vector<2x16x128xf32>,
    %c0_i32_15 = arith.constant 0 : i32
    %14 = arith.cmpi eq, %arg1, %c0_i32_15 : i32
    %15 = arith.extui %14 : i1 to i32
    %c0_i32_16 = arith.constant 0 : i32
    %16 = arith.cmpi ne, %15, %c0_i32_16 : i32
    scf.if %16 {
      %c0_17 = arith.constant 0 : index
      %c0_18 = arith.constant 0 : index
      %c0_19 = arith.constant 0 : index
      %17 = vector.load %arg6[%c0_17, %c0_18, %c0_19] : memref<2x16x128xf32, #tpu.memory_space<vmem>>, vector<2x16x128xf32>
      %cst = arith.constant dense<0.000000e+00> : vector<2x16xf32>
      %18 = vector.multi_reduction <add>, %17, %cst [2] : vector<2x16x128xf32> to vector<2x16xf32>
      %cst_20 = arith.constant 3.906250e-03 : f32
      %19 = vector.broadcast %cst_20 : f32 to vector<2x16xf32>
      %20 = arith.mulf %18, %19 : vector<2x16xf32>
      %c0_21 = arith.constant 0 : index
      %c0_22 = arith.constant 0 : index
      %c0_23 = arith.constant 0 : index
      %21 = vector.load %arg7[%c0_21, %c0_22, %c0_23] : memref<2x16x128xf32, #tpu.memory_space<vmem>>, vector<2x16x128xf32>
      %cst_24 = arith.constant dense<0xFF800000> : vector<2x16xf32>
      %22 = vector.multi_reduction <maximumf>, %21, %cst_24 [2] : vector<2x16x128xf32> to vector<2x16xf32>
      %23 = tpu.concatenate %20, %22 in 0 : vector<2x16xf32>, vector<2x16xf32> -> vector<4x16xf32>
      %c0_25 = arith.constant 0 : index
      %c0_26 = arith.constant 0 : index
      %24 = vector.load %arg3[%c0_25, %c0_26] : memref<16x4xf32, #tpu.memory_space<vmem>>, vector<16x4xf32>
      %cst_27 = arith.constant dense<0.000000e+00> : vector<4x4xf32>
      %25 = tpu.matmul %23, %24, %cst_27 {dimension_numbers = #tpu.dot_dimension_numbers<[1], [0], [0], [1], [0, 0, 1, 1], [], []>} : vector<4x16xf32>, vector<16x4xf32>, vector<4x4xf32> -> vector<4x4xf32>
      %cst_28 = arith.constant 0.000000e+00 : f32
      %26 = vector.broadcast %cst_28 : f32 to vector<4x4xf32>
      %27 = arith.maximumf %25, %26 : vector<4x4xf32>
      %c0_29 = arith.constant 0 : index
      %c0_30 = arith.constant 0 : index
      %28 = vector.load %arg4[%c0_29, %c0_30] : memref<4x16xf32, #tpu.memory_space<vmem>>, vector<4x16xf32>
      %cst_31 = arith.constant dense<0.000000e+00> : vector<4x16xf32>
      %29 = tpu.matmul %27, %28, %cst_31 {dimension_numbers = #tpu.dot_dimension_numbers<[1], [0], [0], [1], [0, 0, 1, 1], [], []>} : vector<4x4xf32>, vector<4x16xf32>, vector<4x16xf32> -> vector<4x16xf32>
      %30 = vector.extract_strided_slice %29 {offsets = [0, 0], sizes = [2, 16], strides = [1, 1]} : vector<4x16xf32> to vector<2x16xf32>
      %31 = vector.extract_strided_slice %29 {offsets = [2, 0], sizes = [2, 16], strides = [1, 1]} : vector<4x16xf32> to vector<2x16xf32>
      %32 = arith.addf %30, %31 : vector<2x16xf32>
      %33 = arith.negf %32 : vector<2x16xf32>
      %34 = math.exp %33 : vector<2x16xf32>
      %cst_32 = arith.constant 1.000000e+00 : f32
      %35 = vector.broadcast %cst_32 : f32 to vector<2x16xf32>
      %36 = arith.addf %35, %34 : vector<2x16xf32>
      %37 = arith.divf %35, %36 : vector<2x16xf32>
      %c0_33 = arith.constant 0 : index
      %c0_34 = arith.constant 0 : index
      %38 = vector.load %arg5[%c0_33, %c0_34] : memref<2x16xf32, #tpu.memory_space<vmem>>, vector<2x16xf32>
      tpu.vector_store %arg5[%c0_33, %c0_34], %37 {strides = array<i32>} : memref<2x16xf32, #tpu.memory_space<vmem>>, vector<2x16xf32>,
    } else {
    }
    return
  }
  func.func @transform_0(%arg0: i32, %arg1: i32) -> (i32, i32, i32) {
    %c0_i32 = arith.constant 0 : i32
    %c0_i32_0 = arith.constant 0 : i32
    return %arg0, %c0_i32, %arg1 : i32, i32, i32
  }
  func.func @transform_1(%arg0: i32, %arg1: i32) -> (i32, i32) {
    %c0_i32 = arith.constant 0 : i32
    %c0_i32_0 = arith.constant 0 : i32
    %c0_i32_1 = arith.constant 0 : i32
    return %c0_i32, %c0_i32_0 : i32, i32
  }
  func.func @transform_2(%arg0: i32, %arg1: i32) -> (i32, i32) {
    %c0_i32 = arith.constant 0 : i32
    %c0_i32_0 = arith.constant 0 : i32
    %c0_i32_1 = arith.constant 0 : i32
    return %c0_i32, %c0_i32_0 : i32, i32
  }
  func.func @transform_3(%arg0: i32, %arg1: i32) -> (i32, i32) {
    %c0_i32 = arith.constant 0 : i32
    %c0_i32_0 = arith.constant 0 : i32
    return %arg0, %c0_i32 : i32, i32
  }
}

</mosaic_0001>

<llo_original>
// kernel: tpu_custom_call.1
$region0: #{tpu_custom_call.1}
  #allocation0 [shape = 'u32[]', space=smem, size = 0x4, offset = 0x4, fixed_abs, tag = 'smem constant byte address 0x4 - core index']
  #allocation1 [shape = 'u32[144,128]{1,0:T(1,128)}', space=vmem, size = 0x12000, scoped, tag = 'internal scratch']
  #allocation2 [shape = 'f32[2,16,128]{2,1,0:T(8,128)}', space=vmem, size = 0x4000, scoped, tag = 'scratch operand']
  #allocation3 [shape = 'f32[2,16,128]{2,1,0:T(8,128)}', space=vmem, size = 0x4000, scoped, tag = 'scratch operand']
  %s0 = inlined_call_operand.hbm [shape: f32[2,16,256], index: 0, kind: input, shape index: {}]
  %s1 = inlined_call_operand.vmem [shape: f32[16,4], index: 1, kind: input, shape index: {}]
  %s2 = inlined_call_operand.vmem [shape: f32[4,16], index: 2, kind: input, shape index: {}]
  %s3 = inlined_call_operand.hbm [shape: f32[2,16], index: 3, kind: output, shape index: {}]
  %s4 = sld [smem:[#allocation0]]
  $region34: #{tpu_custom_call.1} parent=0
    _
  %s6 = ssub.s32 1, %s4
  %s7 = scalar_select 0, %s6, %s4
  $region1: #{tpu_custom_call.1} parent=0
    #allocation4 [shape = 'u8[32768]{0}', space=vmem, size = 0x8000, scoped, tag = 'input window, operand 0, single buffered']
    #allocation5 [shape = 's32[1]{0}', space=sflag, size = 0x4, scoped, tag = 'scoped memory for tpu_custom_call.1']
    #allocation6 [shape = 's32[1]{0}', space=sflag, size = 0x4, scoped, tag = 'scoped memory for tpu_custom_call.1']
    #allocation7 [shape = 'u8[1024]{0}', space=vmem, size = 0x400, scoped, tag = 'output window, operand 0, single buffered']
    %8 = vsyncpa [#allocation5], 0
    %9 = vsyncpa [#allocation6], 0
    // Predicated region
    $region2: #{tpu_custom_call.1} parent=1 // pred_check
      _
    $region3: #{tpu_custom_call.1} parent=1 // pred_check_branch
      %11 = sbr.rel (0) target = $region5
    $region4: #{tpu_custom_call.1} parent=1 // pred_region
      %s13 = ssub.s32 1024, 1024
      %14 = vsyncadd [#allocation5], %s13
      %s15 = sshll.u32 [#allocation4], 4
      %s16 = int_to_ptr.vmem [resolvable:$true] %s15
      %21 = dma.hbm_to_vmem [thread:$0]  %s0, 1024, %s16, [#allocation5], 256, 256, 16
    $region5: #{tpu_custom_call.1} parent=1 // pred_fallthru
      _
    // Predicated region
    $region6: #{tpu_custom_call.1} parent=1 // pred_check
      _
    $region7: #{tpu_custom_call.1} parent=1 // pred_check_branch
      %23 = sbr.rel (0) target = $region9
    $region8: #{tpu_custom_call.1} parent=1 // pred_region
      _
    $region9: #{tpu_custom_call.1} parent=1 // pred_fallthru
      _
    // Predicated region
    $region10: #{tpu_custom_call.1} parent=1 // pred_check
      _
    $region11: #{tpu_custom_call.1} parent=1 // pred_check_branch
      %25 = sbr.rel (0) target = $region13
    $region12: #{tpu_custom_call.1} parent=1 // pred_region
      _
    $region13: #{tpu_custom_call.1} parent=1 // pred_fallthru
      _
    // Predicated region
    $region14: #{tpu_custom_call.1} parent=1 // pred_check
      _
    $region15: #{tpu_custom_call.1} parent=1 // pred_check_branch
      %27 = sbr.rel (0) target = $region17
    $region16: #{tpu_custom_call.1} parent=1 // pred_region
      %28 = dma.done [#allocation5], 1024
    $region17: #{tpu_custom_call.1} parent=1 // pred_fallthru
      _
    %p29 = scmp.eq.s32.totalorder 0, 0
    // Predicated region
    $region18: #{tpu_custom_call.1} parent=1 // pred_check
      %p30 = pneg %p29
    $region19: #{tpu_custom_call.1} parent=1 // pred_check_branch
      %32 = sbr.rel (%p30) target = $region21
    $region20: #{tpu_custom_call.1} parent=1 // pred_region
      %33 = vst [vmem:[#allocation2] sm:$0xff] 0.0
      %34 = vst [vmem:[#allocation2 + $0x8] sm:$0xff] 0.0
      %35 = vst [vmem:[#allocation2 + $0x10] sm:$0xff] 0.0
      %36 = vst [vmem:[#allocation2 + $0x18] sm:$0xff] 0.0
      %37 = vst [vmem:[#allocation3] sm:$0xff] -inf
      %38 = vst [vmem:[#allocation3 + $0x8] sm:$0xff] -inf
      %39 = vst [vmem:[#allocation3 + $0x10] sm:$0xff] -inf
      %40 = vst [vmem:[#allocation3 + $0x18] sm:$0xff] -inf
    $region21: #{tpu_custom_call.1} parent=1 // pred_fallthru
      _
    %v41 = vld [vmem:[#allocation4] sm:$0xff]
    %v42 = vld [vmem:[#allocation4 + $0x8] sm:$0xff]
    %v43 = vld [vmem:[#allocation4 + $0x10] sm:$0xff]
    %v44 = vld [vmem:[#allocation4 + $0x18] sm:$0xff]
    %v45 = vld [vmem:[#allocation4 + $0x20] sm:$0xff]
    %v46 = vld [vmem:[#allocation4 + $0x28] sm:$0xff]
    %v47 = vld [vmem:[#allocation4 + $0x30] sm:$0xff]
    %v48 = vld [vmem:[#allocation4 + $0x38] sm:$0xff]
    %v49 = vadd.f32 %v41, %v42
    %v50 = vadd.f32 %v43, %v44
    %v51 = vadd.f32 %v45, %v46
    %v52 = vadd.f32 %v47, %v48
    %v53 = vmax.f32 %v41, %v42
    %v54 = vmax.f32 %v43, %v44
    %v55 = vmax.f32 %v45, %v46
    %v56 = vmax.f32 %v47, %v48
    %v57 = vld [vmem:[#allocation2] sm:$0xff]
    %v58 = vld [vmem:[#allocation2 + $0x8] sm:$0xff]
    %v59 = vld [vmem:[#allocation2 + $0x10] sm:$0xff]
    %v60 = vld [vmem:[#allocation2 + $0x18] sm:$0xff]
    %v61 = vadd.f32 %v57, %v49
    %v62 = vadd.f32 %v58, %v50
    %v63 = vadd.f32 %v59, %v51
    %v64 = vadd.f32 %v60, %v52
    %65 = vst [vmem:[#allocation2] sm:$0xff] %v61
    %66 = vst [vmem:[#allocation2 + $0x8] sm:$0xff] %v62
    %67 = vst [vmem:[#allocation2 + $0x10] sm:$0xff] %v63
    %68 = vst [vmem:[#allocation2 + $0x18] sm:$0xff] %v64
    %v69 = vld [vmem:[#allocation3] sm:$0xff]
    %v70 = vld [vmem:[#allocation3 + $0x8] sm:$0xff]
    %v71 = vld [vmem:[#allocation3 + $0x10] sm:$0xff]
    %v72 = vld [vmem:[#allocation3 + $0x18] sm:$0xff]
    %v73 = vmax.f32 %v69, %v53
    %v74 = vmax.f32 %v70, %v54
    %v75 = vmax.f32 %v71, %v55
    %v76 = vmax.f32 %v72, %v56
    %77 = vst [vmem:[#allocation3] sm:$0xff] %v73
    %78 = vst [vmem:[#allocation3 + $0x8] sm:$0xff] %v74
    %79 = vst [vmem:[#allocation3 + $0x10] sm:$0xff] %v75
    %80 = vst [vmem:[#allocation3 + $0x18] sm:$0xff] %v76
    // Predicated region
    $region22: #{tpu_custom_call.1} parent=1 // pred_check
      %p81 = pneg %p29
    $region23: #{tpu_custom_call.1} parent=1 // pred_check_branch
      %83 = sbr.rel (%p81) target = $region25
    $region24: #{tpu_custom_call.1} parent=1 // pred_region
      %v84 = vld [vmem:[#allocation2] sm:$0xff]
      %v85 = vld [vmem:[#allocation2 + $0x8] sm:$0xff]
      %v86 = vld [vmem:[#allocation2 + $0x10] sm:$0xff]
      %v87 = vld [vmem:[#allocation2 + $0x18] sm:$0xff]
      %88 = vadd.xlane.f32.xlu0 %v84
      %v89 = vpop.xlane.xlu0 %88
      %90 = vadd.xlane.f32.xlu0 %v85
      %v91 = vpop.xlane.xlu0 %90
      %92 = vadd.xlane.f32.xlu0 %v86
      %v93 = vpop.xlane.xlu0 %92
      %94 = vadd.xlane.f32.xlu0 %v87
      %v95 = vpop.xlane.xlu0 %94
      %v96 = vmul.f32 %v89, 0.00390625
      %v97 = vmul.f32 %v91, 0.00390625
      %v98 = vmul.f32 %v93, 0.00390625
      %v99 = vmul.f32 %v95, 0.00390625
      %v100 = vld [vmem:[#allocation3] sm:$0xff]
      %v101 = vld [vmem:[#allocation3 + $0x8] sm:$0xff]
      %v102 = vld [vmem:[#allocation3 + $0x10] sm:$0xff]
      %v103 = vld [vmem:[#allocation3 + $0x18] sm:$0xff]
      %104 = vmax.xlane.f32.xlu0 %v100
      %v105 = vpop.xlane.xlu0 %104
      %106 = vmax.xlane.f32.xlu0 %v101
      %v107 = vpop.xlane.xlu0 %106
      %108 = vmax.xlane.f32.xlu0 %v102
      %v109 = vpop.xlane.xlu0 %108
      %110 = vmax.xlane.f32.xlu0 %v103
      %v111 = vpop.xlane.xlu0 %110
      %v116 = vlaneseq
      %v117 = vand.u32 %v116, 127
      %v118 = vlaneseq
      %v119 = vshrl.u32 %v118, 7
      %v120 = vsub.s32 %v117, %v119
      %v121 = vrot.slane %v96, %v120
      %v122 = vadd.s32 %v117, 4294967288
      %v123 = vlaneseq
      %v124 = vshrl.u32 %v123, 7
      %v125 = vsub.s32 %v122, %v124
      %v126 = vrot.slane %v97, %v125
      %vm127 = vcmask 130112
      %v128 = vsel %vm127, %v126, %v121
      %v129 = vlaneseq
      %v130 = vshrl.u32 %v129, 7
      %v131 = vsub.s32 %v117, %v130
      %v132 = vrot.slane %v98, %v131
      %v133 = vlaneseq
      %v134 = vshrl.u32 %v133, 7
      %v135 = vsub.s32 %v122, %v134
      %v136 = vrot.slane %v99, %v135
      %v137 = vsel %vm127, %v136, %v132
      %vm138 = vcmask 1041409
      %v139 = vsel %vm138, %v137, %v128
      %v145 = vlaneseq
      %v146 = vshrl.u32 %v145, 7
      %v147 = vsub.s32 %v117, %v146
      %v148 = vrot.slane %v105, %v147
      %v149 = vlaneseq
      %v150 = vshrl.u32 %v149, 7
      %v151 = vsub.s32 %v122, %v150
      %v152 = vrot.slane %v107, %v151
      %v153 = vsel %vm127, %v152, %v148
      %v154 = vlaneseq
      %v155 = vshrl.u32 %v154, 7
      %v156 = vsub.s32 %v117, %v155
      %v157 = vrot.slane %v109, %v156
      %v158 = vlaneseq
      %v159 = vshrl.u32 %v158, 7
      %v160 = vsub.s32 %v122, %v159
      %v161 = vrot.slane %v111, %v160
      %v162 = vsel %vm127, %v161, %v157
      %vm163 = vcmask 1043459
      %v164 = vsel %vm163, %v162, %v153
      %vm166 = vcmask 1041408
      %v167 = vsel %vm166, %v139, %v164
      %v168 = vld [vmem:[%s1] sm:$0xff]
      %v169 = vld [vmem:[%s1 + $0x8] sm:$0xff]
      %vm170 = vcmask 130048
      %v172 = vsel %vm170, %v167, 0
      %174 = vmatprep.subr.mxu0 0.0
      %175 = vmatpush1.msra.mxu0 %v168
      %176 = vmatprep.subr.mxu0 0.0
      %177 = vmatpush1.msra.mxu0 %v169
      %178 = vmatprep.subr.mxu0 0.0
      %179 = vmatpush1.msra.mxu0 0.0
      %180 = vmatprep.subr.mxu0 0.0
      %181 = vmatpush1.msra.mxu0 0.0
      %182 = vmatprep.subr.mxu0 0.0
      %183 = vmatpush1.msra.mxu0 0.0
      %184 = vmatprep.subr.mxu0 0.0
      %185 = vmatpush1.msra.mxu0 0.0
      %186 = vmatprep.subr.mxu0 0.0
      %187 = vmatpush1.msra.mxu0 0.0
      %188 = vmatprep.subr.mxu0 0.0
      %189 = vmatpush1.msra.mxu0 0.0
      %190 = vmatprep.subr.mxu0 0.0
      %191 = vmatpush1.msra.mxu0 0.0
      %192 = vmatprep.subr.mxu0 0.0
      %193 = vmatpush1.msra.mxu0 0.0
      %194 = vmatprep.subr.mxu0 0.0
      %195 = vmatpush1.msra.mxu0 0.0
      %196 = vmatprep.subr.mxu0 0.0
      %197 = vmatpush1.msra.mxu0 0.0
      %198 = vmatprep.subr.mxu0 0.0
      %199 = vmatpush1.msra.mxu0 0.0
      %200 = vmatprep.subr.mxu0 0.0
      %201 = vmatpush1.msra.mxu0 0.0
      %202 = vmatprep.subr.mxu0 0.0
      %203 = vmatpush1.msra.mxu0 0.0
      %204 = vmatprep.subr.mxu0 0.0
      %205 = vmatpush1.msra.mxu0 0.0
      %206 = vmatprep.subr.mxu0 0.0
      %207 = vmatpush1.msra.mxu0 0.0
      %208 = vmatprep.subr.mxu0 0.0
      %209 = vmatpush1.msra.mxu0 0.0
      %210 = vmatprep.subr.mxu0 0.0
      %211 = vmatpush1.msra.mxu0 0.0
      %212 = vmatprep.subr.mxu0 0.0
      %213 = vmatpush1.msra.mxu0 0.0
      %214 = vmatprep.subr.mxu0 0.0
      %215 = vmatpush1.msra.mxu0 0.0
      %216 = vmatprep.subr.mxu0 0.0
      %217 = vmatpush1.msra.mxu0 0.0
      %218 = vmatprep.subr.mxu0 0.0
      %219 = vmatpush1.msra.mxu0 0.0
      %220 = vmatprep.subr.mxu0 0.0
      %221 = vmatpush1.msra.mxu0 0.0
      %222 = vmatprep.subr.mxu0 0.0
      %223 = vmatpush1.msra.mxu0 0.0
      %224 = vmatprep.subr.mxu0 0.0
      %225 = vmatpush1.msra.mxu0 0.0
      %226 = vmatprep.subr.mxu0 0.0
      %227 = vmatpush1.msra.mxu0 0.0
      %228 = vmatprep.subr.mxu0 0.0
      %229 = vmatpush1.msra.mxu0 0.0
      %230 = vmatprep.subr.mxu0 0.0
      %231 = vmatpush1.msra.mxu0 0.0
      %232 = vmatprep.subr.mxu0 0.0
      %233 = vmatpush1.msra.mxu0 0.0
      %234 = vmatprep.subr.mxu0 0.0
      %235 = vmatpush1.msra.mxu0 0.0
      %236 = vmatprep.subr.mxu0 0.0
      %237 = vmatpush1.msra.mxu0 0.0
      %238 = vmatprep.mubr.f32.mxu0 0.0
      %239 = vmatmul.mubr.f32.gmra.mrb[0].mxu0 %v172
      %v240 = vpop.f32.mrb[0].mxu0
      %v241 = vadd.f32 0.0, %v240
      %v242 = vpop.f32.mrb[0].mxu0
      %243 = vdwg.mxu0
      %v244 = vmax.f32 %v241, 0.0
      %v245 = vld [vmem:[%s2] sm:$0xf]
      %vm246 = vcmask 31744
      %v248 = vsel %vm246, %v244, 0
      %vm250 = vcmask 1043456
      %v252 = vsel %vm250, %v245, 0
      %254 = vmatprep.subr.mxu0 0.0
      %255 = vmatpush1.msra.mxu0 %v252
      %256 = vmatprep.subr.mxu0 0.0
      %257 = vmatpush1.msra.mxu0 0.0
      %258 = vmatprep.subr.mxu0 0.0
      %259 = vmatpush1.msra.mxu0 0.0
      %260 = vmatprep.subr.mxu0 0.0
      %261 = vmatpush1.msra.mxu0 0.0
      %262 = vmatprep.subr.mxu0 0.0
      %263 = vmatpush1.msra.mxu0 0.0
      %264 = vmatprep.subr.mxu0 0.0
      %265 = vmatpush1.msra.mxu0 0.0
      %266 = vmatprep.subr.mxu0 0.0
      %267 = vmatpush1.msra.mxu0 0.0
      %268 = vmatprep.subr.mxu0 0.0
      %269 = vmatpush1.msra.mxu0 0.0
      %270 = vmatprep.subr.mxu0 0.0
      %271 = vmatpush1.msra.mxu0 0.0
      %272 = vmatprep.subr.mxu0 0.0
      %273 = vmatpush1.msra.mxu0 0.0
      %274 = vmatprep.subr.mxu0 0.0
      %275 = vmatpush1.msra.mxu0 0.0
      %276 = vmatprep.subr.mxu0 0.0
      %277 = vmatpush1.msra.mxu0 0.0
      %278 = vmatprep.subr.mxu0 0.0
      %279 = vmatpush1.msra.mxu0 0.0
      %280 = vmatprep.subr.mxu0 0.0
      %281 = vmatpush1.msra.mxu0 0.0
      %282 = vmatprep.subr.mxu0 0.0
      %283 = vmatpush1.msra.mxu0 0.0
      %284 = vmatprep.subr.mxu0 0.0
      %285 = vmatpush1.msra.mxu0 0.0
      %286 = vmatprep.subr.mxu0 0.0
      %287 = vmatpush1.msra.mxu0 0.0
      %288 = vmatprep.subr.mxu0 0.0
      %289 = vmatpush1.msra.mxu0 0.0
      %290 = vmatprep.subr.mxu0 0.0
      %291 = vmatpush1.msra.mxu0 0.0
      %292 = vmatprep.subr.mxu0 0.0
      %293 = vmatpush1.msra.mxu0 0.0
      %294 = vmatprep.subr.mxu0 0.0
      %295 = vmatpush1.msra.mxu0 0.0
      %296 = vmatprep.subr.mxu0 0.0
      %297 = vmatpush1.msra.mxu0 0.0
      %298 = vmatprep.subr.mxu0 0.0
      %299 = vmatpush1.msra.mxu0 0.0
      %300 = vmatprep.subr.mxu0 0.0
      %301 = vmatpush1.msra.mxu0 0.0
      %302 = vmatprep.subr.mxu0 0.0
      %303 = vmatpush1.msra.mxu0 0.0
      %304 = vmatprep.subr.mxu0 0.0
      %305 = vmatpush1.msra.mxu0 0.0
      %306 = vmatprep.subr.mxu0 0.0
      %307 = vmatpush1.msra.mxu0 0.0
      %308 = vmatprep.subr.mxu0 0.0
      %309 = vmatpush1.msra.mxu0 0.0
      %310 = vmatprep.subr.mxu0 0.0
      %311 = vmatpush1.msra.mxu0 0.0
      %312 = vmatprep.subr.mxu0 0.0
      %313 = vmatpush1.msra.mxu0 0.0
      %314 = vmatprep.subr.mxu0 0.0
      %315 = vmatpush1.msra.mxu0 0.0
      %316 = vmatprep.subr.mxu0 0.0
      %317 = vmatpush1.msra.mxu0 0.0
      %318 = vmatprep.mubr.f32.mxu0 0.0
      %319 = vmatmul.mubr.f32.gmra.mrb[0].mxu0 %v248
      %v320 = vpop.f32.mrb[0].mxu0
      %v321 = vadd.f32 0.0, %v320
      %v322 = vpop.f32.mrb[0].mxu0
      %323 = vdwg.mxu0
      %v325 = vrot.slane %v321, 2
      %v327 = vadd.f32 %v321, %v325
      %v328 = vxor.u32 %v327, 2147483648
      %v329 = vmul.f32 %v328, 1.442695
      %v330 = vpow.pop %v329
      %v331 = vadd.f32 %v330, 1.0
      %v332 = vrcp.pop %v331
      %v333 = vmul.f32 1.0, %v332
      %vm334 = vcmask 123904
      %335 = vst.msk [vmem:[#allocation7] sm:$0x3] %vm334, %v333
    $region25: #{tpu_custom_call.1} parent=1 // pred_fallthru
      _
    // Predicated region
    $region26: #{tpu_custom_call.1} parent=1 // pred_check
      _
    $region27: #{tpu_custom_call.1} parent=1 // pred_check_branch
      %337 = sbr.rel (0) target = $region29
    $region28: #{tpu_custom_call.1} parent=1 // pred_region
      %s339 = ssub.s32 32, 32
      %340 = vsyncadd [#allocation6], %s339
      %s342 = sshll.u32 [#allocation7], 4
      %s343 = int_to_ptr.vmem [resolvable:$true] %s342
      %345 = dma.vmem_to_hbm [thread:$0]  %s343, 32, %s3, [#allocation6]
    $region29: #{tpu_custom_call.1} parent=1 // pred_fallthru
      _
    // Predicated region
    $region30: #{tpu_custom_call.1} parent=1 // pred_check
      _
    $region31: #{tpu_custom_call.1} parent=1 // pred_check_branch
      %347 = sbr.rel (0) target = $region33
    $region32: #{tpu_custom_call.1} parent=1 // pred_region
      %348 = dma.done [#allocation6], 32
    $region33: #{tpu_custom_call.1} parent=1 // pred_fallthru
      _
    %349 = vsyncpa [#allocation5], 1
    %350 = vsyncpa [#allocation6], 1

</llo_original>
